<compile_context>
chip_gen: v5e
topology: v5e:2x2
jax: 0.10.0
libtpu: 0.0.40
codegen_flags: <defaults>
</compile_context>

<pallas_src>
import functools

import jax
import jax.numpy as jnp
from jax import lax
from jax.experimental import pallas as pl
from jax.experimental.pallas import tpu as pltpu

LANES = 128
MAX_ROW_TILE = 1024  # 1024*128*4B = 512 KiB per input per pipeline buffer


def _soft_dice_kernel(x_ref, t_ref, o_ref, acc_prod, acc_sum, *,
                      n_valid, row_tile, need_mask):
    i = pl.program_id(0)

    @pl.when(i == 0)
    def _():
        acc_prod[...] = jnp.zeros_like(acc_prod)
        acc_sum[...] = jnp.zeros_like(acc_sum)

    # Cast in-kernel so narrow dtypes stream from HBM at their native width.
    x = x_ref[...].astype(jnp.float32)
    t = t_ref[...].astype(jnp.float32)
    s = jax.nn.sigmoid(x)          # EUP work, hidden under DMA

    prod = s * t                   # intersection terms
    tot = s + t                    # fused sum(iflat) + sum(tflat)

    if need_mask:
        # Mask elements past the true flat length (lane-pad and/or the
        # undefined region of a partial last block).
        base = i * (row_tile * LANES)
        flat_idx = (base
                    + lax.broadcasted_iota(jnp.int32, (row_tile, LANES), 0) * LANES
                    + lax.broadcasted_iota(jnp.int32, (row_tile, LANES), 1))
        mask = flat_idx < n_valid
        prod = jnp.where(mask, prod, 0.0)
        tot = jnp.where(mask, tot, 0.0)

    # Fold the tile down to one vreg and accumulate on the VPU: no per-step
    # cross-lane XLU reduce, no per-step scalar SMEM RMW, better numerics.
    acc_prod[...] += prod.reshape(-1, 8, LANES).sum(axis=0)
    acc_sum[...] += tot.reshape(-1, 8, LANES).sum(axis=0)

    @pl.when(i == pl.num_programs(0) - 1)
    def _():
        smooth = 1.0
        inter = jnp.sum(acc_prod[...])
        sums = jnp.sum(acc_sum[...])
        o_ref[0, 0] = 1.0 - (2.0 * inter + smooth) / (sums + smooth)


@jax.jit
def soft_dice_loss(logits, targets):
    assert logits.shape == targets.shape
    n = logits.size

    if targets.dtype == jnp.bool_:
        targets = targets.astype(jnp.float32)

    lf = logits.reshape(-1)
    tf = targets.reshape(-1)

    rem = n % LANES
    if rem != 0:
        # TODO(synk): the sub-128 ragged tail still costs one jnp.pad copy; a
        # 1-D block layout with flat-index masking would remove it entirely.
        pad = LANES - rem
        lf = jnp.pad(lf, (0, pad))
        tf = jnp.pad(tf, (0, pad))

    rows = lf.shape[0] // LANES
    lf2 = lf.reshape(rows, LANES)
    tf2 = tf.reshape(rows, LANES)

    row_tile = min(MAX_ROW_TILE, ((rows + 7) // 8) * 8)   # multiple of 8
    grid_steps = pl.cdiv(rows, row_tile)
    covered = grid_steps * row_tile * LANES
    need_mask = covered > n    # any lane padding and/or partial last block

    kernel = functools.partial(
        _soft_dice_kernel, n_valid=n, row_tile=row_tile, need_mask=need_mask)

    out = pl.pallas_call(
        kernel,
        out_shape=jax.ShapeDtypeStruct((1, 1), jnp.float32),
        grid_spec=pltpu.PrefetchScalarGridSpec(
            num_scalar_prefetch=0,
            grid=(grid_steps,),
            in_specs=[
                pl.BlockSpec((row_tile, LANES), lambda i: (i, 0)),
                pl.BlockSpec((row_tile, LANES), lambda i: (i, 0)),
            ],
            out_specs=pl.BlockSpec((1, 1), lambda i: (0, 0),
                                   memory_space=pltpu.SMEM),
            scratch_shapes=[
                pltpu.VMEM((8, LANES), jnp.float32),   # sum(iflat * tflat)
                pltpu.VMEM((8, LANES), jnp.float32),   # sum(iflat + tflat)
            ],
        ),
        compiler_params=pltpu.CompilerParams(
            dimension_semantics=("arbitrary",)),
    )(lf2, tf2)
    return out[0, 0]


def _reference(logits, targets):
    s = jax.nn.sigmoid(logits.astype(jnp.float32)).reshape(-1)
    t = targets.astype(jnp.float32).reshape(-1)
    smooth = 1.0
    inter = jnp.sum(s * t)
    return 1.0 - (2.0 * inter + smooth) / (jnp.sum(s) + jnp.sum(t) + smooth)


if __name__ == "__main__":
    key = jax.random.PRNGKey(0)
    k1, k2, k3, k4 = jax.random.split(key, 4)

    # NCHW, like the conv-output / mask pair the PyTorch module expects.
    logits = jax.random.normal(k1, (2, 4, 16, 16), dtype=jnp.float32)
    targets = (jax.random.uniform(k2, (2, 4, 16, 16)) > 0.5).astype(jnp.float32)

    loss = soft_dice_loss(logits, targets)
    jax.block_until_ready(loss)
    ref = _reference(logits, targets)
    assert jnp.allclose(loss, ref, atol=1e-5, rtol=1e-5), (loss, ref)

    # Ragged shape exercising the in-kernel tail-mask / partial-block path.
    logits2 = jax.random.normal(k3, (2, 3, 9, 11), dtype=jnp.float32)
    targets2 = (jax.random.uniform(k4, (2, 3, 9, 11)) > 0.5).astype(jnp.float32)
    loss2 = soft_dice_loss(logits2, targets2)
    jax.block_until_ready(loss2)
    ref2 = _reference(logits2, targets2)
    assert jnp.allclose(loss2, ref2, atol=1e-5, rtol=1e-5), (loss2, ref2)

    print("KERNEL_OK")
</pallas_src>

<mosaic_0001>
module attributes {stable_mosaic.version = 11 : i64} {
  func.func @_soft_dice_kernel(%arg0: i32, %arg1: memref<16x128xf32, #tpu.memory_space<vmem>>, %arg2: memref<16x128xf32, #tpu.memory_space<vmem>>, %arg3: memref<1x1xf32, #tpu.memory_space<smem>>, %arg4: memref<8x128xf32, #tpu.memory_space<vmem>>, %arg5: memref<8x128xf32, #tpu.memory_space<vmem>>) attributes {dimension_semantics = [#tpu.dimension_semantics<arbitrary>], iteration_bounds = array<i64: 1>, scalar_prefetch = 0 : i64, scratch_operands = 2 : i64, tpu.core_type = #tpu.core_type<tc>, window_params = [{transform_indices = @transform_0, window_bounds = array<i64: 16, 128>}, {transform_indices = @transform_1, window_bounds = array<i64: 16, 128>}, {transform_indices = @transform_2, window_bounds = array<i64: 1, 1>}]} {
    %c0_i32 = arith.constant 0 : i32
    %0 = arith.cmpi eq, %arg0, %c0_i32 : i32
    %1 = arith.extui %0 : i1 to i32
    %c0_i32_0 = arith.constant 0 : i32
    %2 = arith.cmpi ne, %1, %c0_i32_0 : i32
    scf.if %2 {
      %cst_16 = arith.constant 0.000000e+00 : f32
      %25 = vector.broadcast %cst_16 : f32 to vector<8x128xf32>
      %c0_17 = arith.constant 0 : index
      %c0_18 = arith.constant 0 : index
      %26 = vector.load %arg4[%c0_17, %c0_18] : memref<8x128xf32, #tpu.memory_space<vmem>>, vector<8x128xf32>
      tpu.vector_store %arg4[%c0_17, %c0_18], %25 {strides = array<i32>} : memref<8x128xf32, #tpu.memory_space<vmem>>, vector<8x128xf32>,
      %cst_19 = arith.constant 0.000000e+00 : f32
      %27 = vector.broadcast %cst_19 : f32 to vector<8x128xf32>
      %c0_20 = arith.constant 0 : index
      %c0_21 = arith.constant 0 : index
      %28 = vector.load %arg5[%c0_20, %c0_21] : memref<8x128xf32, #tpu.memory_space<vmem>>, vector<8x128xf32>
      tpu.vector_store %arg5[%c0_20, %c0_21], %27 {strides = array<i32>} : memref<8x128xf32, #tpu.memory_space<vmem>>, vector<8x128xf32>,
    } else {
    }
    %c0 = arith.constant 0 : index
    %c0_1 = arith.constant 0 : index
    %3 = vector.load %arg1[%c0, %c0_1] : memref<16x128xf32, #tpu.memory_space<vmem>>, vector<16x128xf32>
    %c0_2 = arith.constant 0 : index
    %c0_3 = arith.constant 0 : index
    %4 = vector.load %arg2[%c0_2, %c0_3] : memref<16x128xf32, #tpu.memory_space<vmem>>, vector<16x128xf32>
    %5 = arith.negf %3 : vector<16x128xf32>
    %6 = math.exp %5 : vector<16x128xf32>
    %cst = arith.constant 1.000000e+00 : f32
    %7 = vector.broadcast %cst : f32 to vector<16x128xf32>
    %8 = arith.addf %7, %6 : vector<16x128xf32>
    %9 = arith.divf %7, %8 : vector<16x128xf32>
    %10 = arith.mulf %9, %4 : vector<16x128xf32>
    %11 = arith.addf %9, %4 : vector<16x128xf32>
    %c0_4 = arith.constant 0 : index
    %c0_5 = arith.constant 0 : index
    %12 = vector.load %arg4[%c0_4, %c0_5] : memref<8x128xf32, #tpu.memory_space<vmem>>, vector<8x128xf32>
    %13 = vector.shape_cast %10 : vector<16x128xf32> to vector<2x8x128xf32>
    %cst_6 = arith.constant dense<0.000000e+00> : vector<8x128xf32>
    %14 = vector.multi_reduction <add>, %13, %cst_6 [0] : vector<2x8x128xf32> to vector<8x128xf32>
    %15 = arith.addf %12, %14 : vector<8x128xf32>
    %c0_7 = arith.constant 0 : index
    %c0_8 = arith.constant 0 : index
    %16 = vector.load %arg4[%c0_7, %c0_8] : memref<8x128xf32, #tpu.memory_space<vmem>>, vector<8x128xf32>
    tpu.vector_store %arg4[%c0_7, %c0_8], %15 {strides = array<i32>} : memref<8x128xf32, #tpu.memory_space<vmem>>, vector<8x128xf32>,
    %c0_9 = arith.constant 0 : index
    %c0_10 = arith.constant 0 : index
    %17 = vector.load %arg5[%c0_9, %c0_10] : memref<8x128xf32, #tpu.memory_space<vmem>>, vector<8x128xf32>
    %18 = vector.shape_cast %11 : vector<16x128xf32> to vector<2x8x128xf32>
    %cst_11 = arith.constant dense<0.000000e+00> : vector<8x128xf32>
    %19 = vector.multi_reduction <add>, %18, %cst_11 [0] : vector<2x8x128xf32> to vector<8x128xf32>
    %20 = arith.addf %17, %19 : vector<8x128xf32>
    %c0_12 = arith.constant 0 : index
    %c0_13 = arith.constant 0 : index
    %21 = vector.load %arg5[%c0_12, %c0_13] : memref<8x128xf32, #tpu.memory_space<vmem>>, vector<8x128xf32>
    tpu.vector_store %arg5[%c0_12, %c0_13], %20 {strides = array<i32>} : memref<8x128xf32, #tpu.memory_space<vmem>>, vector<8x128xf32>,
    %c0_i32_14 = arith.constant 0 : i32
    %22 = arith.cmpi eq, %arg0, %c0_i32_14 : i32
    %23 = arith.extui %22 : i1 to i32
    %c0_i32_15 = arith.constant 0 : i32
    %24 = arith.cmpi ne, %23, %c0_i32_15 : i32
    scf.if %24 {
      %c0_16 = arith.constant 0 : index
      %c0_17 = arith.constant 0 : index
      %25 = vector.load %arg4[%c0_16, %c0_17] : memref<8x128xf32, #tpu.memory_space<vmem>>, vector<8x128xf32>
      %26 = vector.shape_cast %25 : vector<8x128xf32> to vector<1x8x128xf32>
      %cst_18 = arith.constant dense<0.000000e+00> : vector<1xf32>
      %27 = vector.multi_reduction <add>, %26, %cst_18 [1, 2] : vector<1x8x128xf32> to vector<1xf32>
      %28 = vector.shape_cast %27 : vector<1xf32> to vector<1x1x1xf32>
      %29 = vector.extract %28[0, 0, 0] : f32 from vector<1x1x1xf32>
      %c0_19 = arith.constant 0 : index
      %c0_20 = arith.constant 0 : index
      %30 = vector.load %arg5[%c0_19, %c0_20] : memref<8x128xf32, #tpu.memory_space<vmem>>, vector<8x128xf32>
      %31 = vector.shape_cast %30 : vector<8x128xf32> to vector<1x8x128xf32>
      %cst_21 = arith.constant dense<0.000000e+00> : vector<1xf32>
      %32 = vector.multi_reduction <add>, %31, %cst_21 [1, 2] : vector<1x8x128xf32> to vector<1xf32>
      %33 = vector.shape_cast %32 : vector<1xf32> to vector<1x1x1xf32>
      %34 = vector.extract %33[0, 0, 0] : f32 from vector<1x1x1xf32>
      %cst_22 = arith.constant 2.000000e+00 : f32
      %35 = arith.mulf %cst_22, %29 : f32
      %cst_23 = arith.constant 1.000000e+00 : f32
      %36 = arith.addf %35, %cst_23 : f32
      %cst_24 = arith.constant 1.000000e+00 : f32
      %37 = arith.addf %34, %cst_24 : f32
      %38 = arith.divf %36, %37 : f32
      %cst_25 = arith.constant 1.000000e+00 : f32
      %39 = arith.subf %cst_25, %38 : f32
      %c0_26 = arith.constant 0 : index
      %c0_27 = arith.constant 0 : index
      %40 = memref.load %arg3[%c0_26, %c0_27] : memref<1x1xf32, #tpu.memory_space<smem>>
      memref.store %39, %arg3[%c0_26, %c0_27] : memref<1x1xf32, #tpu.memory_space<smem>>
    } else {
    }
    return
  }
  func.func @transform_0(%arg0: i32) -> (i32, i32) {
    %c0_i32 = arith.constant 0 : i32
    %c0_i32_0 = arith.constant 0 : i32
    return %arg0, %c0_i32 : i32, i32
  }
  func.func @transform_1(%arg0: i32) -> (i32, i32) {
    %c0_i32 = arith.constant 0 : i32
    %c0_i32_0 = arith.constant 0 : i32
    return %arg0, %c0_i32 : i32, i32
  }
  func.func @transform_2(%arg0: i32) -> (i32, i32) {
    %c0_i32 = arith.constant 0 : i32
    %c0_i32_0 = arith.constant 0 : i32
    %c0_i32_1 = arith.constant 0 : i32
    return %c0_i32, %c0_i32_0 : i32, i32
  }
}

</mosaic_0001>

<llo_original>
// kernel: soft_dice_loss.1
$region0: #{soft_dice_loss.1}
  #allocation0 [shape = 'u32[]', space=smem, size = 0x4, offset = 0x4, fixed_abs, tag = 'smem constant byte address 0x4 - core index']
  #allocation1 [shape = 'u32[72,128]{1,0:T(1,128)}', space=vmem, size = 0x9000, scoped, tag = 'internal scratch']
  #allocation2 [shape = 'f32[8,128]{1,0:T(8,128)}', space=vmem, size = 0x1000, scoped, tag = 'scratch operand']
  #allocation3 [shape = 'f32[8,128]{1,0:T(8,128)}', space=vmem, size = 0x1000, scoped, tag = 'scratch operand']
  %s0 = inlined_call_operand.vmem [shape: f32[16,128], index: 0, kind: input, shape index: {}]
  %s1 = inlined_call_operand.vmem [shape: f32[16,128], index: 1, kind: input, shape index: {}]
  %s2 = inlined_call_operand.hbm [shape: f32[1,1], index: 2, kind: output, shape index: {}]
  %s3 = sld [smem:[#allocation0]]
  $region26: #{soft_dice_loss.1} parent=0
    _
  %s5 = ssub.s32 1, %s3
  %s6 = scalar_select 0, %s5, %s3
  $region1: #{soft_dice_loss.1} parent=0
    #allocation4 [shape = 'u8[512]{0}', space=smem, size = 0x200, scoped, tag = 'output window, operand 0, single buffered']
    #allocation5 [shape = 's32[1]{0}', space=sflag, size = 0x4, scoped, tag = 'scoped memory for soft_dice_loss.1']
    %7 = vsyncpa [#allocation5], 0
    // Predicated region
    $region2: #{soft_dice_loss.1} parent=1 // pred_check
      _
    $region3: #{soft_dice_loss.1} parent=1 // pred_check_branch
      %9 = sbr.rel (0) target = $region5
    $region4: #{soft_dice_loss.1} parent=1 // pred_region
      _
    $region5: #{soft_dice_loss.1} parent=1 // pred_fallthru
      _
    // Predicated region
    $region6: #{soft_dice_loss.1} parent=1 // pred_check
      _
    $region7: #{soft_dice_loss.1} parent=1 // pred_check_branch
      %11 = sbr.rel (0) target = $region9
    $region8: #{soft_dice_loss.1} parent=1 // pred_region
      _
    $region9: #{soft_dice_loss.1} parent=1 // pred_fallthru
      _
    %p12 = scmp.eq.s32.totalorder 0, 0
    // Predicated region
    $region10: #{soft_dice_loss.1} parent=1 // pred_check
      %p13 = pneg %p12
    $region11: #{soft_dice_loss.1} parent=1 // pred_check_branch
      %15 = sbr.rel (%p13) target = $region13
    $region12: #{soft_dice_loss.1} parent=1 // pred_region
      %16 = vst [vmem:[#allocation2] sm:$0xff] 0.0
      %17 = vst [vmem:[#allocation3] sm:$0xff] 0.0
    $region13: #{soft_dice_loss.1} parent=1 // pred_fallthru
      _
    %v18 = vld [vmem:[%s0] sm:$0xff]
    %v19 = vld [vmem:[%s0 + $0x8] sm:$0xff]
    %v20 = vld [vmem:[%s1] sm:$0xff]
    %v21 = vld [vmem:[%s1 + $0x8] sm:$0xff]
    %v22 = vxor.u32 %v18, 2147483648
    %v23 = vxor.u32 %v19, 2147483648
    %v24 = vmul.f32 %v22, 1.442695
    %v25 = vpow.pop %v24
    %v26 = vmul.f32 %v23, 1.442695
    %v27 = vpow.pop %v26
    %v28 = vadd.f32 %v25, 1.0
    %v29 = vadd.f32 %v27, 1.0
    %v30 = vrcp.pop %v28
    %v31 = vmul.f32 %v28, %v30
    %v32 = vsub.f32 1.0, %v31
    %v33 = vmul.f32 %v30, %v32
    %v34 = vadd.f32 %v30, %v33
    %vm35 = vweird.f32 %v28
    %vm36 = vweird.f32 %v30
    %vm37 = vmor %vm35, %vm36
    %v38 = vsel %vm37, %v30, %v34
    %v39 = vand.u32 2147483647, %v28
    %vm40 = vcmp.eq.f32.partialorder %v39, 8.507059e+37
    %v41 = vand.u32 %v28, 2147483648
    %v42 = vor.u32 1.1754944e-38, %v41
    %v43 = vsel %vm40, %v42, %v38
    %v44 = vmul.f32 1.0, %v43
    %v45 = vrcp.pop %v29
    %v46 = vmul.f32 %v29, %v45
    %v47 = vsub.f32 1.0, %v46
    %v48 = vmul.f32 %v45, %v47
    %v49 = vadd.f32 %v45, %v48
    %vm50 = vweird.f32 %v29
    %vm51 = vweird.f32 %v45
    %vm52 = vmor %vm50, %vm51
    %v53 = vsel %vm52, %v45, %v49
    %v54 = vand.u32 2147483647, %v29
    %vm55 = vcmp.eq.f32.partialorder %v54, 8.507059e+37
    %v56 = vand.u32 %v29, 2147483648
    %v57 = vor.u32 1.1754944e-38, %v56
    %v58 = vsel %vm55, %v57, %v53
    %v59 = vmul.f32 1.0, %v58
    %v60 = vmul.f32 %v44, %v20
    %v61 = vmul.f32 %v59, %v21
    %v62 = vadd.f32 %v44, %v20
    %v63 = vadd.f32 %v59, %v21
    %v64 = vld [vmem:[#allocation2] sm:$0xff]
    %v65 = vadd.f32 %v60, %v61
    %v66 = vadd.f32 %v64, %v65
    %67 = vst [vmem:[#allocation2] sm:$0xff] %v66
    %v68 = vld [vmem:[#allocation3] sm:$0xff]
    %v69 = vadd.f32 %v62, %v63
    %v70 = vadd.f32 %v68, %v69
    %71 = vst [vmem:[#allocation3] sm:$0xff] %v70
    // Predicated region
    $region14: #{soft_dice_loss.1} parent=1 // pred_check
      %p72 = pneg %p12
    $region15: #{soft_dice_loss.1} parent=1 // pred_check_branch
      %74 = sbr.rel (%p72) target = $region17
    $region16: #{soft_dice_loss.1} parent=1 // pred_region
      %v75 = vld [vmem:[#allocation2] sm:$0xff]
      %76 = vadd.xlane.f32.xlu0 %v75
      %v77 = vpop.xlane.xlu0 %76
      %v78 = vrot.slane %v77, 4
      %v79 = vadd.f32 %v77, %v78
      %v80 = vrot.slane %v79, 2
      %v81 = vadd.f32 %v79, %v80
      %v82 = vrot.slane %v81, 1
      %v83 = vadd.f32 %v81, %v82
      %s84 = vtos %v83
      %v85 = vld [vmem:[#allocation3] sm:$0xff]
      %86 = vadd.xlane.f32.xlu0 %v85
      %v87 = vpop.xlane.xlu0 %86
      %v88 = vrot.slane %v87, 4
      %v89 = vadd.f32 %v87, %v88
      %v90 = vrot.slane %v89, 2
      %v91 = vadd.f32 %v89, %v90
      %v92 = vrot.slane %v91, 1
      %v93 = vadd.f32 %v91, %v92
      %s94 = vtos %v93
      %s95 = smul.f32 %s84, 2.0
      %s96 = sadd.f32 %s95, 1.0
      %s97 = sadd.f32 %s94, 1.0
      %v98 = vstv %s97
      %v99 = vrcp.pop %v98
      %v100 = vmul.f32 %v98, %v99
      %v101 = vsub.f32 1.0, %v100
      %v102 = vmul.f32 %v99, %v101
      %v103 = vadd.f32 %v99, %v102
      %vm104 = vweird.f32 %v98
      %vm105 = vweird.f32 %v99
      %vm106 = vmor %vm104, %vm105
      %v107 = vsel %vm106, %v99, %v103
      %v108 = vand.u32 2147483647, %v98
      %vm109 = vcmp.eq.f32.partialorder %v108, 8.507059e+37
      %v110 = vand.u32 %v98, 2147483648
      %v111 = vor.u32 1.1754944e-38, %v110
      %v112 = vsel %vm109, %v111, %v107
      %s113 = vtos %v112
      %s114 = smul.f32 %s96, %s113
      %s115 = ssub.f32 1.0, %s114
      %s116 = scalar_lea.smem [#allocation4], 0
      %117 = sst [smem:[%s116]] %s115
    $region17: #{soft_dice_loss.1} parent=1 // pred_fallthru
      _
    // Predicated region
    $region18: #{soft_dice_loss.1} parent=1 // pred_check
      _
    $region19: #{soft_dice_loss.1} parent=1 // pred_check_branch
      %119 = sbr.rel (0) target = $region21
    $region20: #{soft_dice_loss.1} parent=1 // pred_region
      %121 = vsyncadd [#allocation5], 0
      %s123 = sshll.u32 %s2, 4
      %s124 = int_to_ptr.hbm [resolvable:$true] %s123
      %126 = dma.smem_to_hbm [#allocation4], 16, %s124, [#allocation5]
    $region21: #{soft_dice_loss.1} parent=1 // pred_fallthru
      _
    // Predicated region
    $region22: #{soft_dice_loss.1} parent=1 // pred_check
      _
    $region23: #{soft_dice_loss.1} parent=1 // pred_check_branch
      %128 = sbr.rel (0) target = $region25
    $region24: #{soft_dice_loss.1} parent=1 // pred_region
      %130 = dma.done [#allocation5], 16
    $region25: #{soft_dice_loss.1} parent=1 // pred_fallthru
      _
    %131 = sfence
    %132 = vsyncpa [#allocation5], 1

</llo_original>
